<compile_context>
chip_gen: v7x
topology: tpu7x:2x2x1
jax: 0.10.0
libtpu: 0.0.40
codegen_flags: <defaults>
</compile_context>

<pallas_src>
import jax
import jax.numpy as jnp
from jax.experimental import pallas as pl
from jax.experimental.pallas import tpu as pltpu


# ----------------------------------------------------------------------------
# Tiled matmul kernels (+ optional bias epilogue)
# ----------------------------------------------------------------------------

def _matmul_kernel(a_ref, b_ref, o_ref, acc_ref):
    k = pl.program_id(2)

    @pl.when(k == 0)
    def _init():
        acc_ref[...] = jnp.zeros_like(acc_ref)

    acc_ref[...] += jnp.dot(a_ref[...], b_ref[...],
                            preferred_element_type=jnp.float32)

    @pl.when(k == pl.num_programs(2) - 1)
    def _store():
        o_ref[...] = acc_ref[...].astype(o_ref.dtype)


def _matmul_bias_kernel(a_ref, b_ref, bias_ref, o_ref, acc_ref):
    k = pl.program_id(2)

    @pl.when(k == 0)
    def _init():
        acc_ref[...] = jnp.zeros_like(acc_ref)

    acc_ref[...] += jnp.dot(a_ref[...], b_ref[...],
                            preferred_element_type=jnp.float32)

    @pl.when(k == pl.num_programs(2) - 1)
    def _store():
        # Bias added once, in the epilogue, in f32.
        o_ref[...] = (acc_ref[...] + bias_ref[...]).astype(o_ref.dtype)


def _matmul_single_k_kernel(a_ref, b_ref, o_ref):
    o_ref[...] = jnp.dot(a_ref[...], b_ref[...],
                         preferred_element_type=jnp.float32).astype(o_ref.dtype)


def _matmul_single_k_bias_kernel(a_ref, b_ref, bias_ref, o_ref):
    acc = jnp.dot(a_ref[...], b_ref[...], preferred_element_type=jnp.float32)
    o_ref[...] = (acc + bias_ref[...]).astype(o_ref.dtype)


# ----------------------------------------------------------------------------
# Padding helpers
# ----------------------------------------------------------------------------

def _round_up(x, m):
    return (x + m - 1) // m * m


def _pad2d(x, rows, cols):
    r, c = x.shape
    if r == rows and c == cols:
        return x
    return jnp.pad(x, ((0, rows - r), (0, cols - c)))


def _dim_and_tile(dim, preferred, granularity):
    """Return (padded_dim, tile). Small dims become a single full-width tile."""
    if dim >= preferred:
        return _round_up(dim, preferred), preferred
    padded = _round_up(dim, granularity)
    return padded, padded


# ----------------------------------------------------------------------------
# Tiled matmul wrapper
# ----------------------------------------------------------------------------

def tiled_matmul(a, b, bias=None, *, out_dtype=jnp.float32,
                 tm=256, tn=256, tk=256,
                 vmem_limit_bytes=48 * 1024 * 1024):
    """C = A @ B (+ bias), tiled over (M/tm, N/tn, K/tk), f32 accumulation."""
    m, k = a.shape
    k2, n = b.shape
    assert k == k2, (a.shape, b.shape)

    m_p, tm = _dim_and_tile(m, tm, 16)    # sublane axis (bf16-safe granularity)
    k_p, tk = _dim_and_tile(k, tk, 128)   # lane axis of A / sublane of B
    n_p, tn = _dim_and_tile(n, tn, 128)   # lane axis of B and output

    a_p = _pad2d(a, m_p, k_p)
    b_p = _pad2d(b, k_p, n_p)

    k_tiles = k_p // tk
    inputs = [a_p, b_p]

    if bias is not None:
        bias_p = _pad2d(bias.reshape(1, n).astype(jnp.float32), 1, n_p)
        inputs.append(bias_p)

    if k_tiles == 1:
        # Whole contraction in one tile: no accumulator scratch needed.
        grid = (m_p // tm, n_p // tn)
        in_specs = [
            pl.BlockSpec((tm, tk), lambda i, j: (i, 0)),
            pl.BlockSpec((tk, tn), lambda i, j: (0, j)),
        ]
        if bias is not None:
            in_specs.append(pl.BlockSpec((1, tn), lambda i, j: (0, j)))
            kernel = _matmul_single_k_bias_kernel
        else:
            kernel = _matmul_single_k_kernel
        out_specs = pl.BlockSpec((tm, tn), lambda i, j: (i, j))
        scratch_shapes = []
        dim_sem = ("parallel", "parallel")
    else:
        grid = (m_p // tm, n_p // tn, k_tiles)
        in_specs = [
            pl.BlockSpec((tm, tk), lambda i, j, kk: (i, kk)),
            pl.BlockSpec((tk, tn), lambda i, j, kk: (kk, j)),
        ]
        if bias is not None:
            in_specs.append(pl.BlockSpec((1, tn), lambda i, j, kk: (0, j)))
            kernel = _matmul_bias_kernel
        else:
            kernel = _matmul_kernel
        out_specs = pl.BlockSpec((tm, tn), lambda i, j, kk: (i, j))
        scratch_shapes = [pltpu.VMEM((tm, tn), jnp.float32)]
        dim_sem = ("parallel", "parallel", "arbitrary")

    out = pl.pallas_call(
        kernel,
        out_shape=jax.ShapeDtypeStruct((m_p, n_p), out_dtype),
        grid_spec=pltpu.PrefetchScalarGridSpec(
            num_scalar_prefetch=0,
            grid=grid,
            in_specs=in_specs,
            out_specs=out_specs,
            scratch_shapes=scratch_shapes,
        ),
        compiler_params=pltpu.CompilerParams(
            dimension_semantics=dim_sem,
            vmem_limit_bytes=vmem_limit_bytes,
        ),
    )(*inputs)

    if (m_p, n_p) != (m, n):
        out = out[:m, :n]
    return out


# ----------------------------------------------------------------------------
# GraphConvolution forward
# ----------------------------------------------------------------------------

def graph_convolution(adjacency, input_feature, weight, bias=None):
    """adjacency: [N, N] dense normalized Laplacian, input_feature: [N, F_in],
       weight: [F_in, F_out], bias: [F_out] or None -> output [N, F_out] (f32)."""
    n, f_in = input_feature.shape
    f_out = weight.shape[1]
    assert adjacency.shape == (n, n)
    assert weight.shape[0] == f_in

    # bf16 operands, f32 accumulation (MXU-native bf16 path, halves adjacency
    # HBM traffic).
    adj16 = adjacency.astype(jnp.bfloat16)
    x16 = input_feature.astype(jnp.bfloat16)
    w16 = weight.astype(jnp.bfloat16)

    if f_in <= f_out:
        # (A @ X) @ W : the N^2 matmul contracts the narrower feature dim.
        h = tiled_matmul(adj16, x16, out_dtype=jnp.bfloat16)
        out = tiled_matmul(h, w16, bias=bias, out_dtype=jnp.float32)
    else:
        # A @ (X @ W) : support computed once, then aggregated.
        support = tiled_matmul(x16, w16, out_dtype=jnp.bfloat16)
        out = tiled_matmul(adj16, support, bias=bias, out_dtype=jnp.float32)
    return out


def kaiming_uniform(key, shape, dtype=jnp.float32):
    # Matches torch.nn.init.kaiming_uniform_ defaults (a=0, fan_in mode,
    # leaky_relu gain = sqrt(2)).
    fan_in = shape[0]
    gain = jnp.sqrt(2.0)
    bound = gain * jnp.sqrt(3.0 / fan_in)
    return jax.random.uniform(key, shape, dtype=dtype, minval=-bound, maxval=bound)


if __name__ == "__main__":
    # Small, deterministic example, big enough to exercise the tiled grid:
    # aggregation matmul is [512,512]@[512,128] -> 2x1 output tiles, 2 k-tiles;
    # projection matmul uses the single-k fast path (K = F_IN = 64).
    N = 512        # number of graph nodes
    F_IN = 64      # input feature dim
    F_OUT = 128    # output feature dim

    key = jax.random.PRNGKey(0)
    k_adj, k_feat, k_w, k_b = jax.random.split(key, 4)

    # Synthetic normalized adjacency (dense stand-in for D^-1/2 A D^-1/2).
    a_raw = (jax.random.uniform(k_adj, (N, N)) < 0.1).astype(jnp.float32)
    a_sym = jnp.maximum(a_raw, a_raw.T) + jnp.eye(N, dtype=jnp.float32)
    deg = jnp.sum(a_sym, axis=1)
    d_inv_sqrt = 1.0 / jnp.sqrt(deg)
    adjacency = a_sym * d_inv_sqrt[:, None] * d_inv_sqrt[None, :]

    input_feature = jax.random.normal(k_feat, (N, F_IN), dtype=jnp.float32)

    # Parameters (GraphConvolution.__init__ / reset_parameters). Bias is made
    # nonzero here so the bias epilogue is actually exercised.
    weight = kaiming_uniform(k_w, (F_IN, F_OUT))
    bias = 0.1 * jax.random.normal(k_b, (F_OUT,), dtype=jnp.float32)

    out = graph_convolution(adjacency, input_feature, weight, bias)
    out = jax.block_until_ready(out)
    assert out.shape == (N, F_OUT)

    # Reference 1: same data path (bf16 inputs, f32 accumulation, same order).
    a16 = adjacency.astype(jnp.bfloat16)
    x16 = input_feature.astype(jnp.bfloat16)
    w16 = weight.astype(jnp.bfloat16)
    h16 = jnp.dot(a16, x16, preferred_element_type=jnp.float32).astype(jnp.bfloat16)
    ref_bf16 = jnp.dot(h16, w16, preferred_element_type=jnp.float32) + bias
    assert jnp.allclose(out, ref_bf16, atol=1e-2, rtol=1e-2), \
        float(jnp.max(jnp.abs(out - ref_bf16)))

    # Reference 2: pure-f32 module semantics (loose tol for bf16 inputs).
    ref_f32 = adjacency @ (input_feature @ weight) + bias
    assert jnp.allclose(out, ref_f32, atol=1e-1, rtol=1e-1), \
        float(jnp.max(jnp.abs(out - ref_f32)))

    print("KERNEL_OK")
</pallas_src>

<mosaic_0001>
module attributes {stable_mosaic.version = 11 : i64} {
  func.func @_matmul_kernel(%arg0: i32, %arg1: i32, %arg2: i32, %arg3: memref<256x256xbf16, #tpu.memory_space<vmem>>, %arg4: memref<256x128xbf16, #tpu.memory_space<vmem>>, %arg5: memref<256x128xbf16, #tpu.memory_space<vmem>>, %arg6: memref<256x128xf32, #tpu.memory_space<vmem>>) attributes {dimension_semantics = [#tpu.dimension_semantics<parallel>, #tpu.dimension_semantics<parallel>, #tpu.dimension_semantics<arbitrary>], iteration_bounds = array<i64: 2, 1, 2>, scalar_prefetch = 0 : i64, scratch_operands = 1 : i64, tpu.core_type = #tpu.core_type<tc>, window_params = [{transform_indices = @transform_0, window_bounds = array<i64: 256, 256>}, {transform_indices = @transform_1, window_bounds = array<i64: 256, 128>}, {transform_indices = @transform_2, window_bounds = array<i64: 256, 128>}]} {
    %c0_i32 = arith.constant 0 : i32
    %0 = arith.cmpi eq, %arg2, %c0_i32 : i32
    %1 = arith.extui %0 : i1 to i32
    %c0_i32_0 = arith.constant 0 : i32
    %2 = arith.cmpi ne, %1, %c0_i32_0 : i32
    scf.if %2 {
      %cst_9 = arith.constant 0.000000e+00 : f32
      %12 = vector.broadcast %cst_9 : f32 to vector<256x128xf32>
      %c0_10 = arith.constant 0 : index
      %c0_11 = arith.constant 0 : index
      %13 = vector.load %arg6[%c0_10, %c0_11] : memref<256x128xf32, #tpu.memory_space<vmem>>, vector<256x128xf32>
      tpu.vector_store %arg6[%c0_10, %c0_11], %12 {strides = array<i32>} : memref<256x128xf32, #tpu.memory_space<vmem>>, vector<256x128xf32>,
    } else {
    }
    %c0 = arith.constant 0 : index
    %c0_1 = arith.constant 0 : index
    %3 = vector.load %arg6[%c0, %c0_1] : memref<256x128xf32, #tpu.memory_space<vmem>>, vector<256x128xf32>
    %c0_2 = arith.constant 0 : index
    %c0_3 = arith.constant 0 : index
    %4 = vector.load %arg3[%c0_2, %c0_3] : memref<256x256xbf16, #tpu.memory_space<vmem>>, vector<256x256xbf16>
    %c0_4 = arith.constant 0 : index
    %c0_5 = arith.constant 0 : index
    %5 = vector.load %arg4[%c0_4, %c0_5] : memref<256x128xbf16, #tpu.memory_space<vmem>>, vector<256x128xbf16>
    %cst = arith.constant dense<0.000000e+00> : vector<256x128xf32>
    %6 = tpu.matmul %4, %5, %cst {dimension_numbers = #tpu.dot_dimension_numbers<[1], [0], [0], [1], [0, 0, 1, 1], [], []>} : vector<256x256xbf16>, vector<256x128xbf16>, vector<256x128xf32> -> vector<256x128xf32>
    %7 = arith.addf %3, %6 : vector<256x128xf32>
    %c0_6 = arith.constant 0 : index
    %c0_7 = arith.constant 0 : index
    %8 = vector.load %arg6[%c0_6, %c0_7] : memref<256x128xf32, #tpu.memory_space<vmem>>, vector<256x128xf32>
    tpu.vector_store %arg6[%c0_6, %c0_7], %7 {strides = array<i32>} : memref<256x128xf32, #tpu.memory_space<vmem>>, vector<256x128xf32>,
    %c1_i32 = arith.constant 1 : i32
    %9 = arith.cmpi eq, %arg2, %c1_i32 : i32
    %10 = arith.extui %9 : i1 to i32
    %c0_i32_8 = arith.constant 0 : i32
    %11 = arith.cmpi ne, %10, %c0_i32_8 : i32
    scf.if %11 {
      %c0_9 = arith.constant 0 : index
      %c0_10 = arith.constant 0 : index
      %12 = vector.load %arg6[%c0_9, %c0_10] : memref<256x128xf32, #tpu.memory_space<vmem>>, vector<256x128xf32>
      %13 = arith.truncf %12 : vector<256x128xf32> to vector<256x128xbf16>
      %c0_11 = arith.constant 0 : index
      %c0_12 = arith.constant 0 : index
      %14 = vector.load %arg5[%c0_11, %c0_12] : memref<256x128xbf16, #tpu.memory_space<vmem>>, vector<256x128xbf16>
      tpu.vector_store %arg5[%c0_11, %c0_12], %13 {strides = array<i32>} : memref<256x128xbf16, #tpu.memory_space<vmem>>, vector<256x128xbf16>,
    } else {
    }
    return
  }
  func.func @transform_0(%arg0: i32, %arg1: i32, %arg2: i32) -> (i32, i32) {
    %c0_i32 = arith.constant 0 : i32
    return %arg0, %arg2 : i32, i32
  }
  func.func @transform_1(%arg0: i32, %arg1: i32, %arg2: i32) -> (i32, i32) {
    %c0_i32 = arith.constant 0 : i32
    return %arg2, %arg1 : i32, i32
  }
  func.func @transform_2(%arg0: i32, %arg1: i32, %arg2: i32) -> (i32, i32) {
    %c0_i32 = arith.constant 0 : i32
    return %arg0, %arg1 : i32, i32
  }
}

</mosaic_0001>

<llo_original>
// kernel: tpu_custom_call.1
$region0: #{tpu_custom_call.1}
  #allocation0 [shape = 'u32[]', space=smem, size = 0x4, offset = 0x4, fixed_abs, tag = 'smem constant byte address 0x4 - core index']
  #allocation1 [shape = 'u32[144,128]{1,0:T(1,128)}', space=vmem, size = 0x12000, scoped, tag = 'internal scratch']
  #allocation2 [shape = 'f32[256,128]{1,0:T(8,128)}', space=vmem, size = 0x20000, scoped, tag = 'scratch operand']
  %s0 = inlined_call_operand.hbm [shape: bf16[512,512], index: 0, kind: input, shape index: {}]
  %s1 = inlined_call_operand.hbm [shape: bf16[512,128], index: 1, kind: input, shape index: {}]
  %s2 = inlined_call_operand.hbm [shape: bf16[512,128], index: 2, kind: output, shape index: {}]
  %s3 = sld [smem:[#allocation0]]
  $region57: #{tpu_custom_call.1} parent=0
    _
  %s5 = ssub.s32 1, %s3
  %s6 = scalar_select 0, %s5, %s3
  $region1: #{tpu_custom_call.1} parent=0
    #allocation3 [shape = 'u8[262144]{0}', space=vmem, size = 0x40000, scoped, tag = 'input window, operand 0']
    #allocation4 [shape = 's32[2]{0}', space=sflag, size = 0x8, scoped, tag = 'scoped memory for tpu_custom_call.1']
    #allocation5 [shape = 's32[2]{0}', space=sflag, size = 0x8, scoped, tag = 'scoped memory for tpu_custom_call.1']
    #allocation6 [shape = 'u8[131072]{0}', space=vmem, size = 0x20000, scoped, tag = 'input window, operand 1']
    #allocation7 [shape = 's32[2]{0}', space=sflag, size = 0x8, scoped, tag = 'scoped memory for tpu_custom_call.1']
    #allocation8 [shape = 'u8[131072]{0}', space=vmem, size = 0x20000, scoped, tag = 'output window, operand 0']
    %7 = vsyncpa [#allocation4], 0
    %s8 = scalar_lea.sflag [#allocation4], 1
    %9 = vsyncpa %s8, 0
    %10 = vsyncpa [#allocation7], 0
    %s11 = scalar_lea.sflag [#allocation7], 1
    %12 = vsyncpa %s11, 0
    %13 = vsyncpa [#allocation5], 0
    %s14 = scalar_lea.sflag [#allocation5], 1
    %15 = vsyncpa %s14, 0
    loop: start=0, step=1, limit=6
    $region2: #{tpu_custom_call.1} parent=1 // loop_pre_header
      _
    $region3: #{tpu_custom_call.1} parent=1 // loop_header
      %s17 = sphi 0, %s21
      %p18 = scmp.ge.s32.totalorder %s17, 6
      %s24 = sphi 0, %s43
      %s25 = sphi 0, %s39
      %s26 = sphi 0, %s35
      %s27 = sphi 0, %s24
      %s28 = sphi 0, %s25
      %s29 = sphi 0, %s26
      %s30 = sphi 0, %s27
      %s31 = sphi 0, %s28
      %s32 = sphi 0, %s29
      %s48 = sphi 0, %s50
      %s51 = sphi 0, %s48
      %s52 = sphi 0, %s51
      %s68 = sphi 0, %s52
      %s76 = sphi 0, %s78
      %s79 = sphi 0, %s76
      %s80 = sphi 0, %s79
      %s96 = sphi 0, %s80
      %s104 = sphi 0, %s106
      %s107 = sphi 0, %s104
      %s108 = sphi 0, %s107
      %s124 = sphi 0, %s108
    $region4: #{tpu_custom_call.1} parent=1 // loop_header_branch
      %20 = sbr.rel (%p18) target = $region8
    $region5: #{tpu_custom_call.1} parent=1 // loop_body
      %s22 = ssub.s32 %s17, 1
      %s23 = ssub.s32 %s17, 2
      %s33 = sadd.s32 1, %s26
      %p34 = scmp.ge.s32.totalorder %s33, 2
      %s35 = scalar_select %p34, 0, %s33
      %s36 = sadd.s32 1, %s25
      %s37 = scalar_select %p34, %s36, %s25
      %p38 = scmp.ge.s32.totalorder %s37, 1
      %s39 = scalar_select %p38, 0, %s37
      %s40 = sadd.s32 1, %s24
      %s41 = scalar_select %p38, %s40, %s24
      %p42 = scmp.ge.s32.totalorder %s41, 2
      %s43 = scalar_select %p42, 0, %s41
      %s44 = ssub.s32 %s24, %s43
      %s45 = ssub.s32 %s26, %s35
      %s46 = sor.u32 %s44, %s45
      %p47 = scmp.eq.s32.totalorder %s46, 0
      %s49 = sadd.s32 %s48, 1
      %s50 = scalar_select %p47, %s48, %s49
      %p53 = pneg %p47
      %p54 = scmp.eq.s32.totalorder %s17, 3
      %p55 = por %p53, %p54
      %p56 = scmp.ne.s32.totalorder %s48, %s51
      %p57 = scmp.eq.s32.totalorder %s17, 0
      %p58 = por %p56, %p57
      %p59 = scmp.ne.s32.totalorder %s48, %s51
      %p60 = scmp.eq.s32.totalorder %s22, 3
      %p61 = por %p59, %p60
      %p62 = scmp.ne.s32.totalorder %s51, %s52
      %p63 = scmp.eq.s32.totalorder %s22, 0
      %p64 = por %p62, %p63
      %p65 = scmp.ne.s32.totalorder %s51, %s52
      %p66 = scmp.eq.s32.totalorder %s23, 3
      %p67 = por %p65, %p66
      %p69 = scmp.ne.s32.totalorder %s52, %s68
      %p70 = scmp.eq.s32.totalorder %s23, 0
      %p71 = por %p69, %p70
      %s72 = ssub.s32 %s26, %s35
      %s73 = ssub.s32 %s25, %s39
      %s74 = sor.u32 %s72, %s73
      %p75 = scmp.eq.s32.totalorder %s74, 0
      %s77 = sadd.s32 %s76, 1
      %s78 = scalar_select %p75, %s76, %s77
      %p81 = pneg %p75
      %p82 = scmp.eq.s32.totalorder %s17, 3
      %p83 = por %p81, %p82
      %p84 = scmp.ne.s32.totalorder %s76, %s79
      %p85 = scmp.eq.s32.totalorder %s17, 0
      %p86 = por %p84, %p85
      %p87 = scmp.ne.s32.totalorder %s76, %s79
      %p88 = scmp.eq.s32.totalorder %s22, 3
      %p89 = por %p87, %p88
      %p90 = scmp.ne.s32.totalorder %s79, %s80
      %p91 = scmp.eq.s32.totalorder %s22, 0
      %p92 = por %p90, %p91
      %p93 = scmp.ne.s32.totalorder %s79, %s80
      %p94 = scmp.eq.s32.totalorder %s23, 3
      %p95 = por %p93, %p94
      %p97 = scmp.ne.s32.totalorder %s80, %s96
      %p98 = scmp.eq.s32.totalorder %s23, 0
      %p99 = por %p97, %p98
      %s100 = ssub.s32 %s24, %s43
      %s101 = ssub.s32 %s25, %s39
      %s102 = sor.u32 %s100, %s101
      %p103 = scmp.eq.s32.totalorder %s102, 0
      %s105 = sadd.s32 %s104, 1
      %s106 = scalar_select %p103, %s104, %s105
      %p109 = pneg %p103
      %p110 = scmp.eq.s32.totalorder %s17, 3
      %p111 = por %p109, %p110
      %p112 = scmp.ne.s32.totalorder %s104, %s107
      %p113 = scmp.eq.s32.totalorder %s17, 0
      %p114 = por %p112, %p113
      %p115 = scmp.ne.s32.totalorder %s104, %s107
      %p116 = scmp.eq.s32.totalorder %s22, 3
      %p117 = por %p115, %p116
      %p118 = scmp.ne.s32.totalorder %s107, %s108
      %p119 = scmp.eq.s32.totalorder %s22, 0
      %p120 = por %p118, %p119
      %p121 = scmp.ne.s32.totalorder %s107, %s108
      %p122 = scmp.eq.s32.totalorder %s23, 3
      %p123 = por %p121, %p122
      %p125 = scmp.ne.s32.totalorder %s108, %s124
      %p126 = scmp.eq.s32.totalorder %s23, 0
      %p127 = por %p125, %p126
      %p128 = scmp.le.s32.totalorder 1, %s17
      %p129 = scmp.lt.s32.totalorder %s17, 5
      %p130 = pnand %p128, %p129
      %p131 = pneg %p130
      // Predicated region
      $region9: #{tpu_custom_call.1} parent=5 // pred_check
        _
      $region10: #{tpu_custom_call.1} parent=5 // pred_check_branch
        %133 = sbr.rel (%p130) target = $region12
      $region11: #{tpu_custom_call.1} parent=5 // pred_region
        %s134 = ssub.s32 %s17, 1
      $region12: #{tpu_custom_call.1} parent=5 // pred_fallthru
        _
      %p135 = scmp.lt.s32.totalorder %s17, 4
      // Predicated region
      $region13: #{tpu_custom_call.1} parent=5 // pred_check
        %p136 = pneg %p135
      $region14: #{tpu_custom_call.1} parent=5 // pred_check_branch
        %138 = sbr.rel (%p136) target = $region16
      $region15: #{tpu_custom_call.1} parent=5 // pred_region
        // Predicated region
        $region17: #{tpu_custom_call.1} parent=15 // pred_check
          %p139 = pneg %p58
        $region18: #{tpu_custom_call.1} parent=15 // pred_check_branch
          %141 = sbr.rel (%p139) target = $region20
        $region19: #{tpu_custom_call.1} parent=15 // pred_region
          %s142 = sand.u32 %s48, 1
          %s143 = scalar_lea.sflag [#allocation4], %s142
          %s144 = sand.u32 %s48, 1
          %s145 = smul.addr %s144, 256
          %s146 = scalar_lea.vmem [#allocation3], %s145
          %s147 = smul.u32 32, %s24
          %s148 = smul.u32 2, %s26
          %s150 = ssub.s32 4096, 4096
          %151 = vsyncadd %s143, %s150
          %s152 = smul.addr %s147, 4
          %s153 = sadd.s32 %s148, %s152
          %s154 = smul.addr %s153, 64
          %s155 = scalar_lea.hbm %s0, %s154
          %s156 = sshll.u32 %s146, 4
          %s157 = int_to_ptr.vmem [resolvable:$true] %s156
          %162 = dma.hbm_to_vmem [thread:$0]  %s155, 4096, %s157, %s143, 256, 128, 8
        $region20: #{tpu_custom_call.1} parent=15 // pred_fallthru
          _
        // Predicated region
        $region21: #{tpu_custom_call.1} parent=15 // pred_check
          %p163 = pneg %p86
        $region22: #{tpu_custom_call.1} parent=15 // pred_check_branch
          %165 = sbr.rel (%p163) target = $region24
        $region23: #{tpu_custom_call.1} parent=15 // pred_region
          %s166 = sand.u32 %s76, 1
          %s167 = scalar_lea.sflag [#allocation7], %s166
          %s168 = sand.u32 %s76, 1
          %s169 = smul.addr %s168, 128
          %s170 = scalar_lea.vmem [#allocation6], %s169
          %s171 = smul.u32 32, %s26
          %s173 = ssub.s32 2048, 2048
          %174 = vsyncadd %s167, %s173
          %s175 = sadd.s32 %s25, %s171
          %s176 = smul.addr %s175, 64
          %s177 = scalar_lea.hbm %s1, %s176
          %s178 = sshll.u32 %s170, 4
          %s179 = int_to_ptr.vmem [resolvable:$true] %s178
          %184 = dma.hbm_to_vmem [thread:$0]  %s177, 2048, %s179, %s167, 64, 64, 4
        $region24: #{tpu_custom_call.1} parent=15 // pred_fallthru
          _
      $region16: #{tpu_custom_call.1} parent=5 // pred_fallthru
        _
      %p185 = scmp.le.s32.totalorder 1, %s17
      %p186 = scmp.lt.s32.totalorder %s17, 5
      %p187 = pnand %p185, %p186
      %p188 = pneg %p187
      // Predicated region
      $region25: #{tpu_custom_call.1} parent=5 // pred_check
        _
      $region26: #{tpu_custom_call.1} parent=5 // pred_check_branch
        %190 = sbr.rel (%p187) target = $region28
      $region27: #{tpu_custom_call.1} parent=5 // pred_region
        %s191 = ssub.s32 %s17, 1
        %s192 = sand.u32 %s51, 1
        %s193 = scalar_lea.sflag [#allocation4], %s192
        %s194 = sand.u32 %s51, 1
        %s195 = smul.addr %s194, 256
        %s196 = scalar_lea.vmem [#allocation3], %s195
        // Predicated region
        $region29: #{tpu_custom_call.1} parent=27 // pred_check
          %p197 = pneg %p64
        $region30: #{tpu_custom_call.1} parent=27 // pred_check_branch
          %199 = sbr.rel (%p197) target = $region32
        $region31: #{tpu_custom_call.1} parent=27 // pred_region
          %200 = dma.done %s193, 4096
        $region32: #{tpu_custom_call.1} parent=27 // pred_fallthru
          _
        %s201 = sand.u32 %s79, 1
        %s202 = scalar_lea.sflag [#allocation7], %s201
        %s203 = sand.u32 %s79, 1
        %s204 = smul.addr %s203, 128
        %s205 = scalar_lea.vmem [#allocation6], %s204
        // Predicated region
        $region33: #{tpu_custom_call.1} parent=27 // pred_check
          %p206 = pneg %p92
        $region34: #{tpu_custom_call.1} parent=27 // pred_check_branch
          %208 = sbr.rel (%p206) target = $region36
        $region35: #{tpu_custom_call.1} parent=27 // pred_region
          %209 = dma.done %s202, 2048
        $region36: #{tpu_custom_call.1} parent=27 // pred_fallthru
          _
        %s210 = sand.u32 %s51, 1
        %s211 = scalar_lea.sflag [#allocation4], %s210
        %s212 = sand.u32 %s51, 1
        %s213 = smul.addr %s212, 256
        %s214 = scalar_lea.vmem [#allocation3], %s213
        %p215 = pneg %p64
        %p216 = pneg %p61
        %s217 = sand.u32 %s79, 1
        %s218 = scalar_lea.sflag [#allocation7], %s217
        %s219 = sand.u32 %s79, 1
        %s220 = smul.addr %s219, 128
        %s221 = scalar_lea.vmem [#allocation6], %s220
        %p222 = pneg %p92
        %p223 = pneg %p89
        %p224 = pneg %p120
        %p225 = pneg %p117
        %s226 = sand.u32 %s107, 1
        %s227 = scalar_lea.sflag [#allocation5], %s226
        %s228 = sand.u32 %s107, 1
        %s229 = smul.addr %s228, 128
        %s230 = scalar_lea.vmem [#allocation8], %s229
        %s231 = smul.u32 32, %s27
        %s232 = smul.u32 2, %s29
        %s233 = smul.u32 32, %s29
        %s234 = smul.u32 32, %s27
        %p236 = scmp.eq.s32.totalorder %s29, 0
        // Predicated region
        $region37: #{tpu_custom_call.1} parent=27 // pred_check
          %p237 = pneg %p236
        $region38: #{tpu_custom_call.1} parent=27 // pred_check_branch
          %239 = sbr.rel (%p237) target = $region40
        $region39: #{tpu_custom_call.1} parent=27 // pred_region
          %240 = vst [vmem:[#allocation2] sm:$0xff] 0.0
          %241 = vst [vmem:[#allocation2 + $0x8] sm:$0xff] 0.0
          %242 = vst [vmem:[#allocation2 + $0x10] sm:$0xff] 0.0
          %243 = vst [vmem:[#allocation2 + $0x18] sm:$0xff] 0.0
          %244 = vst [vmem:[#allocation2 + $0x20] sm:$0xff] 0.0
          %245 = vst [vmem:[#allocation2 + $0x28] sm:$0xff] 0.0
          %246 = vst [vmem:[#allocation2 + $0x30] sm:$0xff] 0.0
          %247 = vst [vmem:[#allocation2 + $0x38] sm:$0xff] 0.0
          %248 = vst [vmem:[#allocation2 + $0x40] sm:$0xff] 0.0
          %249 = vst [vmem:[#allocation2 + $0x48] sm:$0xff] 0.0
          %250 = vst [vmem:[#allocation2 + $0x50] sm:$0xff] 0.0
          %251 = vst [vmem:[#allocation2 + $0x58] sm:$0xff] 0.0
          %252 = vst [vmem:[#allocation2 + $0x60] sm:$0xff] 0.0
          %253 = vst [vmem:[#allocation2 + $0x68] sm:$0xff] 0.0
          %254 = vst [vmem:[#allocation2 + $0x70] sm:$0xff] 0.0
          %255 = vst [vmem:[#allocation2 + $0x78] sm:$0xff] 0.0
          %256 = vst [vmem:[#allocation2 + $0x80] sm:$0xff] 0.0
          %257 = vst [vmem:[#allocation2 + $0x88] sm:$0xff] 0.0
          %258 = vst [vmem:[#allocation2 + $0x90] sm:$0xff] 0.0
          %259 = vst [vmem:[#allocation2 + $0x98] sm:$0xff] 0.0
          %260 = vst [vmem:[#allocation2 + $0xa0] sm:$0xff] 0.0
          %261 = vst [vmem:[#allocation2 + $0xa8] sm:$0xff] 0.0
          %262 = vst [vmem:[#allocation2 + $0xb0] sm:$0xff] 0.0
          %263 = vst [vmem:[#allocation2 + $0xb8] sm:$0xff] 0.0
          %264 = vst [vmem:[#allocation2 + $0xc0] sm:$0xff] 0.0
          %265 = vst [vmem:[#allocation2 + $0xc8] sm:$0xff] 0.0
          %266 = vst [vmem:[#allocation2 + $0xd0] sm:$0xff] 0.0
          %267 = vst [vmem:[#allocation2 + $0xd8] sm:$0xff] 0.0
          %268 = vst [vmem:[#allocation2 + $0xe0] sm:$0xff] 0.0
          %269 = vst [vmem:[#allocation2 + $0xe8] sm:$0xff] 0.0
          %270 = vst [vmem:[#allocation2 + $0xf0] sm:$0xff] 0.0
          %271 = vst [vmem:[#allocation2 + $0xf8] sm:$0xff] 0.0
        $region40: #{tpu_custom_call.1} parent=27 // pred_fallthru
          _
        %v272 = vld [vmem:[#allocation2] sm:$0xff]
        %v273 = vld [vmem:[#allocation2 + $0x8] sm:$0xff]
        %v274 = vld [vmem:[#allocation2 + $0x10] sm:$0xff]
        %v275 = vld [vmem:[#allocation2 + $0x18] sm:$0xff]
        %v276 = vld [vmem:[#allocation2 + $0x20] sm:$0xff]
        %v277 = vld [vmem:[#allocation2 + $0x28] sm:$0xff]
        %v278 = vld [vmem:[#allocation2 + $0x30] sm:$0xff]
        %v279 = vld [vmem:[#allocation2 + $0x38] sm:$0xff]
        %v280 = vld [vmem:[#allocation2 + $0x40] sm:$0xff]
        %v281 = vld [vmem:[#allocation2 + $0x48] sm:$0xff]
        %v282 = vld [vmem:[#allocation2 + $0x50] sm:$0xff]
        %v283 = vld [vmem:[#allocation2 + $0x58] sm:$0xff]
        %v284 = vld [vmem:[#allocation2 + $0x60] sm:$0xff]
        %v285 = vld [vmem:[#allocation2 + $0x68] sm:$0xff]
        %v286 = vld [vmem:[#allocation2 + $0x70] sm:$0xff]
        %v287 = vld [vmem:[#allocation2 + $0x78] sm:$0xff]
        %v288 = vld [vmem:[#allocation2 + $0x80] sm:$0xff]
        %v289 = vld [vmem:[#allocation2 + $0x88] sm:$0xff]
        %v290 = vld [vmem:[#allocation2 + $0x90] sm:$0xff]
        %v291 = vld [vmem:[#allocation2 + $0x98] sm:$0xff]
        %v292 = vld [vmem:[#allocation2 + $0xa0] sm:$0xff]
        %v293 = vld [vmem:[#allocation2 + $0xa8] sm:$0xff]
        %v294 = vld [vmem:[#allocation2 + $0xb0] sm:$0xff]
        %v295 = vld [vmem:[#allocation2 + $0xb8] sm:$0xff]
        %v296 = vld [vmem:[#allocation2 + $0xc0] sm:$0xff]
        %v297 = vld [vmem:[#allocation2 + $0xc8] sm:$0xff]
        %v298 = vld [vmem:[#allocation2 + $0xd0] sm:$0xff]
        %v299 = vld [vmem:[#allocation2 + $0xd8] sm:$0xff]
        %v300 = vld [vmem:[#allocation2 + $0xe0] sm:$0xff]
        %v301 = vld [vmem:[#allocation2 + $0xe8] sm:$0xff]
        %v302 = vld [vmem:[#allocation2 + $0xf0] sm:$0xff]
        %v303 = vld [vmem:[#allocation2 + $0xf8] sm:$0xff]
        %v304 = vld [vmem:[%s196] sm:$0xff]
        %v305 = vld [vmem:[%s196 + $0x8] sm:$0xff]
        %v306 = vld [vmem:[%s196 + $0x10] sm:$0xff]
        %v307 = vld [vmem:[%s196 + $0x18] sm:$0xff]
        %v308 = vld [vmem:[%s196 + $0x20] sm:$0xff]
        %v309 = vld [vmem:[%s196 + $0x28] sm:$0xff]
        %v310 = vld [vmem:[%s196 + $0x30] sm:$0xff]
        %v311 = vld [vmem:[%s196 + $0x38] sm:$0xff]
        %v312 = vld [vmem:[%s196 + $0x40] sm:$0xff]
        %v313 = vld [vmem:[%s196 + $0x48] sm:$0xff]
        %v314 = vld [vmem:[%s196 + $0x50] sm:$0xff]
        %v315 = vld [vmem:[%s196 + $0x58] sm:$0xff]
        %v316 = vld [vmem:[%s196 + $0x60] sm:$0xff]
        %v317 = vld [vmem:[%s196 + $0x68] sm:$0xff]
        %v318 = vld [vmem:[%s196 + $0x70] sm:$0xff]
        %v319 = vld [vmem:[%s196 + $0x78] sm:$0xff]
        %v320 = vld [vmem:[%s196 + $0x80] sm:$0xff]
        %v321 = vld [vmem:[%s196 + $0x88] sm:$0xff]
        %v322 = vld [vmem:[%s196 + $0x90] sm:$0xff]
        %v323 = vld [vmem:[%s196 + $0x98] sm:$0xff]
        %v324 = vld [vmem:[%s196 + $0xa0] sm:$0xff]
        %v325 = vld [vmem:[%s196 + $0xa8] sm:$0xff]
        %v326 = vld [vmem:[%s196 + $0xb0] sm:$0xff]
        %v327 = vld [vmem:[%s196 + $0xb8] sm:$0xff]
        %v328 = vld [vmem:[%s196 + $0xc0] sm:$0xff]
        %v329 = vld [vmem:[%s196 + $0xc8] sm:$0xff]
        %v330 = vld [vmem:[%s196 + $0xd0] sm:$0xff]
        %v331 = vld [vmem:[%s196 + $0xd8] sm:$0xff]
        %v332 = vld [vmem:[%s196 + $0xe0] sm:$0xff]
        %v333 = vld [vmem:[%s196 + $0xe8] sm:$0xff]
        %v334 = vld [vmem:[%s196 + $0xf0] sm:$0xff]
        %v335 = vld [vmem:[%s196 + $0xf8] sm:$0xff]
        %v336 = vld [vmem:[%s205] sm:$0xf]
        %v337 = vld [vmem:[%s205 + $0x4] sm:$0xf]
        %v338 = vld [vmem:[%s205 + $0x8] sm:$0xf]
        %v339 = vld [vmem:[%s205 + $0xc] sm:$0xf]
        %v340 = vld [vmem:[%s205 + $0x10] sm:$0xf]
        %v341 = vld [vmem:[%s205 + $0x14] sm:$0xf]
        %v342 = vld [vmem:[%s205 + $0x18] sm:$0xf]
        %v343 = vld [vmem:[%s205 + $0x1c] sm:$0xf]
        %v344 = vld [vmem:[%s205 + $0x20] sm:$0xf]
        %v345 = vld [vmem:[%s205 + $0x24] sm:$0xf]
        %v346 = vld [vmem:[%s205 + $0x28] sm:$0xf]
        %v347 = vld [vmem:[%s205 + $0x2c] sm:$0xf]
        %v348 = vld [vmem:[%s205 + $0x30] sm:$0xf]
        %v349 = vld [vmem:[%s205 + $0x34] sm:$0xf]
        %v350 = vld [vmem:[%s205 + $0x38] sm:$0xf]
        %v351 = vld [vmem:[%s205 + $0x3c] sm:$0xf]
        %v352 = vld [vmem:[%s205 + $0x40] sm:$0xf]
        %v353 = vld [vmem:[%s205 + $0x44] sm:$0xf]
        %v354 = vld [vmem:[%s205 + $0x48] sm:$0xf]
        %v355 = vld [vmem:[%s205 + $0x4c] sm:$0xf]
        %v356 = vld [vmem:[%s205 + $0x50] sm:$0xf]
        %v357 = vld [vmem:[%s205 + $0x54] sm:$0xf]
        %v358 = vld [vmem:[%s205 + $0x58] sm:$0xf]
        %v359 = vld [vmem:[%s205 + $0x5c] sm:$0xf]
        %v360 = vld [vmem:[%s205 + $0x60] sm:$0xf]
        %v361 = vld [vmem:[%s205 + $0x64] sm:$0xf]
        %v362 = vld [vmem:[%s205 + $0x68] sm:$0xf]
        %v363 = vld [vmem:[%s205 + $0x6c] sm:$0xf]
        %v364 = vld [vmem:[%s205 + $0x70] sm:$0xf]
        %v365 = vld [vmem:[%s205 + $0x74] sm:$0xf]
        %v366 = vld [vmem:[%s205 + $0x78] sm:$0xf]
        %v367 = vld [vmem:[%s205 + $0x7c] sm:$0xf]
        %v400 = vunpack.c.l.b16 %v304
        %v401 = vunpack.c.h.b16 %v304
        %v402 = vunpack.c.l.b16 %v305
        %v403 = vunpack.c.h.b16 %v305
        %v404 = vunpack.c.l.b16 %v306
        %v405 = vunpack.c.h.b16 %v306
        %v406 = vunpack.c.l.b16 %v307
        %v407 = vunpack.c.h.b16 %v307
        %v408 = vunpack.c.l.b16 %v308
        %v409 = vunpack.c.h.b16 %v308
        %v410 = vunpack.c.l.b16 %v309
        %v411 = vunpack.c.h.b16 %v309
        %v412 = vunpack.c.l.b16 %v310
        %v413 = vunpack.c.h.b16 %v310
        %v414 = vunpack.c.l.b16 %v311
        %v415 = vunpack.c.h.b16 %v311
        %v416 = vunpack.c.l.b16 %v312
        %v417 = vunpack.c.h.b16 %v312
        %v418 = vunpack.c.l.b16 %v313
        %v419 = vunpack.c.h.b16 %v313
        %v420 = vunpack.c.l.b16 %v314
        %v421 = vunpack.c.h.b16 %v314
        %v422 = vunpack.c.l.b16 %v315
        %v423 = vunpack.c.h.b16 %v315
        %v424 = vunpack.c.l.b16 %v316
        %v425 = vunpack.c.h.b16 %v316
        %v426 = vunpack.c.l.b16 %v317
        %v427 = vunpack.c.h.b16 %v317
        %v428 = vunpack.c.l.b16 %v318
        %v429 = vunpack.c.h.b16 %v318
        %v430 = vunpack.c.l.b16 %v319
        %v431 = vunpack.c.h.b16 %v319
        %v432 = vunpack.c.l.b16 %v320
        %v433 = vunpack.c.h.b16 %v320
        %v434 = vunpack.c.l.b16 %v321
        %v435 = vunpack.c.h.b16 %v321
        %v436 = vunpack.c.l.b16 %v322
        %v437 = vunpack.c.h.b16 %v322
        %v438 = vunpack.c.l.b16 %v323
        %v439 = vunpack.c.h.b16 %v323
        %v440 = vunpack.c.l.b16 %v324
        %v441 = vunpack.c.h.b16 %v324
        %v442 = vunpack.c.l.b16 %v325
        %v443 = vunpack.c.h.b16 %v325
        %v444 = vunpack.c.l.b16 %v326
        %v445 = vunpack.c.h.b16 %v326
        %v446 = vunpack.c.l.b16 %v327
        %v447 = vunpack.c.h.b16 %v327
        %v448 = vunpack.c.l.b16 %v328
        %v449 = vunpack.c.h.b16 %v328
        %v450 = vunpack.c.l.b16 %v329
        %v451 = vunpack.c.h.b16 %v329
        %v452 = vunpack.c.l.b16 %v330
        %v453 = vunpack.c.h.b16 %v330
        %v454 = vunpack.c.l.b16 %v331
        %v455 = vunpack.c.h.b16 %v331
        %v456 = vunpack.c.l.b16 %v332
        %v457 = vunpack.c.h.b16 %v332
        %v458 = vunpack.c.l.b16 %v333
        %v459 = vunpack.c.h.b16 %v333
        %v460 = vunpack.c.l.b16 %v334
        %v461 = vunpack.c.h.b16 %v334
        %v462 = vunpack.c.l.b16 %v335
        %v463 = vunpack.c.h.b16 %v335
        %v464 = vpack.c.b16 %v402, %v400
        %v465 = vpack.c.b16 %v403, %v401
        %v466 = vpack.c.b16 %v406, %v404
        %v467 = vpack.c.b16 %v407, %v405
        %v468 = vpack.c.b16 %v410, %v408
        %v469 = vpack.c.b16 %v411, %v409
        %v470 = vpack.c.b16 %v414, %v412
        %v471 = vpack.c.b16 %v415, %v413
        %v472 = vpack.c.b16 %v418, %v416
        %v473 = vpack.c.b16 %v419, %v417
        %v474 = vpack.c.b16 %v422, %v420
        %v475 = vpack.c.b16 %v423, %v421
        %v476 = vpack.c.b16 %v426, %v424
        %v477 = vpack.c.b16 %v427, %v425
        %v478 = vpack.c.b16 %v430, %v428
        %v479 = vpack.c.b16 %v431, %v429
        %v480 = vpack.c.b16 %v434, %v432
        %v481 = vpack.c.b16 %v435, %v433
        %v482 = vpack.c.b16 %v438, %v436
        %v483 = vpack.c.b16 %v439, %v437
        %v484 = vpack.c.b16 %v442, %v440
        %v485 = vpack.c.b16 %v443, %v441
        %v486 = vpack.c.b16 %v446, %v444
        %v487 = vpack.c.b16 %v447, %v445
        %v488 = vpack.c.b16 %v450, %v448
        %v489 = vpack.c.b16 %v451, %v449
        %v490 = vpack.c.b16 %v454, %v452
        %v491 = vpack.c.b16 %v455, %v453
        %v492 = vpack.c.b16 %v458, %v456
        %v493 = vpack.c.b16 %v459, %v457
        %v494 = vpack.c.b16 %v462, %v460
        %v495 = vpack.c.b16 %v463, %v461
        %v560 = vunpack.c.l.b16 %v336
        %v561 = vunpack.c.l.b16 %v337
        %v562 = vunpack.c.l.b16 %v338
        %v563 = vunpack.c.l.b16 %v339
        %v564 = vunpack.c.l.b16 %v340
        %v565 = vunpack.c.l.b16 %v341
        %v566 = vunpack.c.l.b16 %v342
        %v567 = vunpack.c.l.b16 %v343
        %v568 = vunpack.c.l.b16 %v344
        %v569 = vunpack.c.l.b16 %v345
        %v570 = vunpack.c.l.b16 %v346
        %v571 = vunpack.c.l.b16 %v347
        %v572 = vunpack.c.l.b16 %v348
        %v573 = vunpack.c.l.b16 %v349
        %v574 = vunpack.c.l.b16 %v350
        %v575 = vunpack.c.l.b16 %v351
        %v576 = vunpack.c.l.b16 %v352
        %v577 = vunpack.c.l.b16 %v353
        %v578 = vunpack.c.l.b16 %v354
        %v579 = vunpack.c.l.b16 %v355
        %v580 = vunpack.c.l.b16 %v356
        %v581 = vunpack.c.l.b16 %v357
        %v582 = vunpack.c.l.b16 %v358
        %v583 = vunpack.c.l.b16 %v359
        %v584 = vunpack.c.l.b16 %v360
        %v585 = vunpack.c.l.b16 %v361
        %v586 = vunpack.c.l.b16 %v362
        %v587 = vunpack.c.l.b16 %v363
        %v588 = vunpack.c.l.b16 %v364
        %v589 = vunpack.c.l.b16 %v365
        %v590 = vunpack.c.l.b16 %v366
        %v591 = vunpack.c.l.b16 %v367
        %v592 = vpack.c.b16 %v561, %v560
        %v593 = vpack.c.b16 %v563, %v562
        %v594 = vpack.c.b16 %v565, %v564
        %v595 = vpack.c.b16 %v567, %v566
        %v596 = vpack.c.b16 %v569, %v568
        %v597 = vpack.c.b16 %v571, %v570
        %v598 = vpack.c.b16 %v573, %v572
        %v599 = vpack.c.b16 %v575, %v574
        %v600 = vpack.c.b16 %v577, %v576
        %v601 = vpack.c.b16 %v579, %v578
        %v602 = vpack.c.b16 %v581, %v580
        %v603 = vpack.c.b16 %v583, %v582
        %v604 = vpack.c.b16 %v585, %v584
        %v605 = vpack.c.b16 %v587, %v586
        %v606 = vpack.c.b16 %v589, %v588
        %v607 = vpack.c.b16 %v591, %v590
        %624 = vmatprep.subr.bf16.mxu0 0
        %625 = vmatpush1.bf16.msra.mxu0 %v592
        %626 = vmatprep.subr.bf16.mxu0 0
        %627 = vmatpush1.bf16.msra.mxu0 %v593
        %628 = vmatprep.subr.bf16.mxu0 0
        %629 = vmatpush1.bf16.msra.mxu0 %v594
        %630 = vmatprep.subr.bf16.mxu0 0
        %631 = vmatpush1.bf16.msra.mxu0 %v595
        %632 = vmatprep.subr.bf16.mxu0 0
        %633 = vmatpush1.bf16.msra.mxu0 %v596
        %634 = vmatprep.subr.bf16.mxu0 0
        %635 = vmatpush1.bf16.msra.mxu0 %v597
        %636 = vmatprep.subr.bf16.mxu0 0
        %637 = vmatpush1.bf16.msra.mxu0 %v598
        %638 = vmatprep.subr.bf16.mxu0 0
        %639 = vmatpush1.bf16.msra.mxu0 %v599
        %640 = vmatprep.subr.bf16.mxu0 0
        %641 = vmatpush1.bf16.msra.mxu0 %v600
        %642 = vmatprep.subr.bf16.mxu0 0
        %643 = vmatpush1.bf16.msra.mxu0 %v601
        %644 = vmatprep.subr.bf16.mxu0 0
        %645 = vmatpush1.bf16.msra.mxu0 %v602
        %646 = vmatprep.subr.bf16.mxu0 0
        %647 = vmatpush1.bf16.msra.mxu0 %v603
        %648 = vmatprep.subr.bf16.mxu0 0
        %649 = vmatpush1.bf16.msra.mxu0 %v604
        %650 = vmatprep.subr.bf16.mxu0 0
        %651 = vmatpush1.bf16.msra.mxu0 %v605
        %652 = vmatprep.subr.bf16.mxu0 0
        %653 = vmatpush1.bf16.msra.mxu0 %v606
        %654 = vmatprep.subr.bf16.mxu0 0
        %655 = vmatpush1.bf16.msra.mxu0 %v607
        %656 = vmatprep.mubr.bf16.mxu0 %v465
        %657 = vmatmul.mubr.bf16.gmra.mrb[0].mxu0 %v464
        %v658 = vpop.f32.mrb[0].mxu0
        %v659 = vadd.f32 0.0, %v658
        %v660 = vpop.f32.mrb[0].mxu0
        %v661 = vpop.f32.mrb[0].mxu0
        %v662 = vadd.f32 0.0, %v661
        %v663 = vpop.f32.mrb[0].mxu0
        %664 = vmatprep.mubr.bf16.mxu0 %v467
        %665 = vmatmul.mubr.bf16.gmra.mrb[0].mxu0 %v466
        %v666 = vpop.f32.mrb[0].mxu0
        %v667 = vadd.f32 0.0, %v666
        %v668 = vpop.f32.mrb[0].mxu0
        %v669 = vpop.f32.mrb[0].mxu0
        %v670 = vadd.f32 0.0, %v669
        %v671 = vpop.f32.mrb[0].mxu0
        %672 = vmatprep.mubr.bf16.mxu0 %v469
        %673 = vmatmul.mubr.bf16.gmra.mrb[0].mxu0 %v468
        %v674 = vpop.f32.mrb[0].mxu0
        %v675 = vadd.f32 0.0, %v674
        %v676 = vpop.f32.mrb[0].mxu0
        %v677 = vpop.f32.mrb[0].mxu0
        %v678 = vadd.f32 0.0, %v677
        %v679 = vpop.f32.mrb[0].mxu0
        %680 = vmatprep.mubr.bf16.mxu0 %v471
        %681 = vmatmul.mubr.bf16.gmra.mrb[0].mxu0 %v470
        %v682 = vpop.f32.mrb[0].mxu0
        %v683 = vadd.f32 0.0, %v682
        %v684 = vpop.f32.mrb[0].mxu0
        %v685 = vpop.f32.mrb[0].mxu0
        %v686 = vadd.f32 0.0, %v685
        %v687 = vpop.f32.mrb[0].mxu0
        %688 = vmatprep.mubr.bf16.mxu0 %v473
        %689 = vmatmul.mubr.bf16.gmra.mrb[0].mxu0 %v472
        %v690 = vpop.f32.mrb[0].mxu0
        %v691 = vadd.f32 0.0, %v690
        %v692 = vpop.f32.mrb[0].mxu0
        %v693 = vpop.f32.mrb[0].mxu0
        %v694 = vadd.f32 0.0, %v693
        %v695 = vpop.f32.mrb[0].mxu0
        %696 = vmatprep.mubr.bf16.mxu0 %v475
        %697 = vmatmul.mubr.bf16.gmra.mrb[0].mxu0 %v474
        %v698 = vpop.f32.mrb[0].mxu0
        %v699 = vadd.f32 0.0, %v698
        %v700 = vpop.f32.mrb[0].mxu0
        %v701 = vpop.f32.mrb[0].mxu0
        %v702 = vadd.f32 0.0, %v701
        %v703 = vpop.f32.mrb[0].mxu0
        %704 = vmatprep.mubr.bf16.mxu0 %v477
        %705 = vmatmul.mubr.bf16.gmra.mrb[0].mxu0 %v476
        %v706 = vpop.f32.mrb[0].mxu0
        %v707 = vadd.f32 0.0, %v706
        %v708 = vpop.f32.mrb[0].mxu0
        %v709 = vpop.f32.mrb[0].mxu0
        %v710 = vadd.f32 0.0, %v709
        %v711 = vpop.f32.mrb[0].mxu0
        %712 = vmatprep.mubr.bf16.mxu0 %v479
        %713 = vmatmul.mubr.bf16.gmra.mrb[0].mxu0 %v478
        %v714 = vpop.f32.mrb[0].mxu0
        %v715 = vadd.f32 0.0, %v714
        %v716 = vpop.f32.mrb[0].mxu0
        %v717 = vpop.f32.mrb[0].mxu0
        %v718 = vadd.f32 0.0, %v717
        %v719 = vpop.f32.mrb[0].mxu0
        %720 = vmatprep.mubr.bf16.mxu0 %v481
        %721 = vmatmul.mubr.bf16.gmra.mrb[0].mxu0 %v480
        %v722 = vpop.f32.mrb[0].mxu0
        %v723 = vadd.f32 0.0, %v722
        %v724 = vpop.f32.mrb[0].mxu0
        %v725 = vpop.f32.mrb[0].mxu0
        %v726 = vadd.f32 0.0, %v725
        %v727 = vpop.f32.mrb[0].mxu0
        %728 = vmatprep.mubr.bf16.mxu0 %v483
        %729 = vmatmul.mubr.bf16.gmra.mrb[0].mxu0 %v482
        %v730 = vpop.f32.mrb[0].mxu0
        %v731 = vadd.f32 0.0, %v730
        %v732 = vpop.f32.mrb[0].mxu0
        %v733 = vpop.f32.mrb[0].mxu0
        %v734 = vadd.f32 0.0, %v733
        %v735 = vpop.f32.mrb[0].mxu0
        %736 = vmatprep.mubr.bf16.mxu0 %v485
        %737 = vmatmul.mubr.bf16.gmra.mrb[0].mxu0 %v484
        %v738 = vpop.f32.mrb[0].mxu0
        %v739 = vadd.f32 0.0, %v738
        %v740 = vpop.f32.mrb[0].mxu0
        %v741 = vpop.f32.mrb[0].mxu0
        %v742 = vadd.f32 0.0, %v741
        %v743 = vpop.f32.mrb[0].mxu0
        %744 = vmatprep.mubr.bf16.mxu0 %v487
        %745 = vmatmul.mubr.bf16.gmra.mrb[0].mxu0 %v486
        %v746 = vpop.f32.mrb[0].mxu0
        %v747 = vadd.f32 0.0, %v746
        %v748 = vpop.f32.mrb[0].mxu0
        %v749 = vpop.f32.mrb[0].mxu0
        %v750 = vadd.f32 0.0, %v749
        %v751 = vpop.f32.mrb[0].mxu0
        %752 = vmatprep.mubr.bf16.mxu0 %v489
        %753 = vmatmul.mubr.bf16.gmra.mrb[0].mxu0 %v488
        %v754 = vpop.f32.mrb[0].mxu0
        %v755 = vadd.f32 0.0, %v754
        %v756 = vpop.f32.mrb[0].mxu0
        %v757 = vpop.f32.mrb[0].mxu0
        %v758 = vadd.f32 0.0, %v757
        %v759 = vpop.f32.mrb[0].mxu0
        %760 = vmatprep.mubr.bf16.mxu0 %v491
        %761 = vmatmul.mubr.bf16.gmra.mrb[0].mxu0 %v490
        %v762 = vpop.f32.mrb[0].mxu0
        %v763 = vadd.f32 0.0, %v762
        %v764 = vpop.f32.mrb[0].mxu0
        %v765 = vpop.f32.mrb[0].mxu0
        %v766 = vadd.f32 0.0, %v765
        %v767 = vpop.f32.mrb[0].mxu0
        %768 = vmatprep.mubr.bf16.mxu0 %v493
        %769 = vmatmul.mubr.bf16.gmra.mrb[0].mxu0 %v492
        %v770 = vpop.f32.mrb[0].mxu0
        %v771 = vadd.f32 0.0, %v770
        %v772 = vpop.f32.mrb[0].mxu0
        %v773 = vpop.f32.mrb[0].mxu0
        %v774 = vadd.f32 0.0, %v773
        %v775 = vpop.f32.mrb[0].mxu0
        %776 = vmatprep.mubr.bf16.mxu0 %v495
        %777 = vmatmul.mubr.bf16.gmra.mrb[0].mxu0 %v494
        %v778 = vpop.f32.mrb[0].mxu0
        %v779 = vadd.f32 0.0, %v778
        %v780 = vpop.f32.mrb[0].mxu0
        %v781 = vpop.f32.mrb[0].mxu0
        %v782 = vadd.f32 0.0, %v781
        %v783 = vpop.f32.mrb[0].mxu0
        %784 = vdwg.mxu0
        %v785 = vadd.f32 %v272, %v659
        %v786 = vadd.f32 %v273, %v662
        %v787 = vadd.f32 %v274, %v667
        %v788 = vadd.f32 %v275, %v670
        %v789 = vadd.f32 %v276, %v675
        %v790 = vadd.f32 %v277, %v678
        %v791 = vadd.f32 %v278, %v683
        %v792 = vadd.f32 %v279, %v686
        %v793 = vadd.f32 %v280, %v691
        %v794 = vadd.f32 %v281, %v694
        %v795 = vadd.f32 %v282, %v699
        %v796 = vadd.f32 %v283, %v702
        %v797 = vadd.f32 %v284, %v707
        %v798 = vadd.f32 %v285, %v710
        %v799 = vadd.f32 %v286, %v715
        %v800 = vadd.f32 %v287, %v718
        %v801 = vadd.f32 %v288, %v723
        %v802 = vadd.f32 %v289, %v726
        %v803 = vadd.f32 %v290, %v731
        %v804 = vadd.f32 %v291, %v734
        %v805 = vadd.f32 %v292, %v739
        %v806 = vadd.f32 %v293, %v742
        %v807 = vadd.f32 %v294, %v747
        %v808 = vadd.f32 %v295, %v750
        %v809 = vadd.f32 %v296, %v755
        %v810 = vadd.f32 %v297, %v758
        %v811 = vadd.f32 %v298, %v763
        %v812 = vadd.f32 %v299, %v766
        %v813 = vadd.f32 %v300, %v771
        %v814 = vadd.f32 %v301, %v774
        %v815 = vadd.f32 %v302, %v779
        %v816 = vadd.f32 %v303, %v782
        %817 = vst [vmem:[#allocation2] sm:$0xff] %v785
        %818 = vst [vmem:[#allocation2 + $0x8] sm:$0xff] %v786
        %819 = vst [vmem:[#allocation2 + $0x10] sm:$0xff] %v787
        %820 = vst [vmem:[#allocation2 + $0x18] sm:$0xff] %v788
        %821 = vst [vmem:[#allocation2 + $0x20] sm:$0xff] %v789
        %822 = vst [vmem:[#allocation2 + $0x28] sm:$0xff] %v790
        %823 = vst [vmem:[#allocation2 + $0x30] sm:$0xff] %v791
        %824 = vst [vmem:[#allocation2 + $0x38] sm:$0xff] %v792
        %825 = vst [vmem:[#allocation2 + $0x40] sm:$0xff] %v793
        %826 = vst [vmem:[#allocation2 + $0x48] sm:$0xff] %v794
        %827 = vst [vmem:[#allocation2 + $0x50] sm:$0xff] %v795
        %828 = vst [vmem:[#allocation2 + $0x58] sm:$0xff] %v796
        %829 = vst [vmem:[#allocation2 + $0x60] sm:$0xff] %v797
        %830 = vst [vmem:[#allocation2 + $0x68] sm:$0xff] %v798
        %831 = vst [vmem:[#allocation2 + $0x70] sm:$0xff] %v799
        %832 = vst [vmem:[#allocation2 + $0x78] sm:$0xff] %v800
        %833 = vst [vmem:[#allocation2 + $0x80] sm:$0xff] %v801
        %834 = vst [vmem:[#allocation2 + $0x88] sm:$0xff] %v802
        %835 = vst [vmem:[#allocation2 + $0x90] sm:$0xff] %v803
        %836 = vst [vmem:[#allocation2 + $0x98] sm:$0xff] %v804
        %837 = vst [vmem:[#allocation2 + $0xa0] sm:$0xff] %v805
        %838 = vst [vmem:[#allocation2 + $0xa8] sm:$0xff] %v806
        %839 = vst [vmem:[#allocation2 + $0xb0] sm:$0xff] %v807
        %840 = vst [vmem:[#allocation2 + $0xb8] sm:$0xff] %v808
        %841 = vst [vmem:[#allocation2 + $0xc0] sm:$0xff] %v809
        %842 = vst [vmem:[#allocation2 + $0xc8] sm:$0xff] %v810
        %843 = vst [vmem:[#allocation2 + $0xd0] sm:$0xff] %v811
        %844 = vst [vmem:[#allocation2 + $0xd8] sm:$0xff] %v812
        %845 = vst [vmem:[#allocation2 + $0xe0] sm:$0xff] %v813
        %846 = vst [vmem:[#allocation2 + $0xe8] sm:$0xff] %v814
        %847 = vst [vmem:[#allocation2 + $0xf0] sm:$0xff] %v815
        %848 = vst [vmem:[#allocation2 + $0xf8] sm:$0xff] %v816
        %p849 = scmp.eq.s32.totalorder %s29, 1
        // Predicated region
        $region41: #{tpu_custom_call.1} parent=27 // pred_check
          %p850 = pneg %p849
        $region42: #{tpu_custom_call.1} parent=27 // pred_check_branch
          %852 = sbr.rel (%p850) target = $region44
        $region43: #{tpu_custom_call.1} parent=27 // pred_region
          %v853 = vld [vmem:[#allocation2] sm:$0xff]
          %v854 = vld [vmem:[#allocation2 + $0x8] sm:$0xff]
          %v855 = vld [vmem:[#allocation2 + $0x10] sm:$0xff]
          %v856 = vld [vmem:[#allocation2 + $0x18] sm:$0xff]
          %v857 = vld [vmem:[#allocation2 + $0x20] sm:$0xff]
          %v858 = vld [vmem:[#allocation2 + $0x28] sm:$0xff]
          %v859 = vld [vmem:[#allocation2 + $0x30] sm:$0xff]
          %v860 = vld [vmem:[#allocation2 + $0x38] sm:$0xff]
          %v861 = vld [vmem:[#allocation2 + $0x40] sm:$0xff]
          %v862 = vld [vmem:[#allocation2 + $0x48] sm:$0xff]
          %v863 = vld [vmem:[#allocation2 + $0x50] sm:$0xff]
          %v864 = vld [vmem:[#allocation2 + $0x58] sm:$0xff]
          %v865 = vld [vmem:[#allocation2 + $0x60] sm:$0xff]
          %v866 = vld [vmem:[#allocation2 + $0x68] sm:$0xff]
          %v867 = vld [vmem:[#allocation2 + $0x70] sm:$0xff]
          %v868 = vld [vmem:[#allocation2 + $0x78] sm:$0xff]
          %v869 = vld [vmem:[#allocation2 + $0x80] sm:$0xff]
          %v870 = vld [vmem:[#allocation2 + $0x88] sm:$0xff]
          %v871 = vld [vmem:[#allocation2 + $0x90] sm:$0xff]
          %v872 = vld [vmem:[#allocation2 + $0x98] sm:$0xff]
          %v873 = vld [vmem:[#allocation2 + $0xa0] sm:$0xff]
          %v874 = vld [vmem:[#allocation2 + $0xa8] sm:$0xff]
          %v875 = vld [vmem:[#allocation2 + $0xb0] sm:$0xff]
          %v876 = vld [vmem:[#allocation2 + $0xb8] sm:$0xff]
          %v877 = vld [vmem:[#allocation2 + $0xc0] sm:$0xff]
          %v878 = vld [vmem:[#allocation2 + $0xc8] sm:$0xff]
          %v879 = vld [vmem:[#allocation2 + $0xd0] sm:$0xff]
          %v880 = vld [vmem:[#allocation2 + $0xd8] sm:$0xff]
          %v881 = vld [vmem:[#allocation2 + $0xe0] sm:$0xff]
          %v882 = vld [vmem:[#allocation2 + $0xe8] sm:$0xff]
          %v883 = vld [vmem:[#allocation2 + $0xf0] sm:$0xff]
          %v884 = vld [vmem:[#allocation2 + $0xf8] sm:$0xff]
          %v885 = vpack.c.bf16 %v854, %v853
          %v886 = vpack.c.bf16 %v856, %v855
          %v887 = vpack.c.bf16 %v858, %v857
          %v888 = vpack.c.bf16 %v860, %v859
          %v889 = vpack.c.bf16 %v862, %v861
          %v890 = vpack.c.bf16 %v864, %v863
          %v891 = vpack.c.bf16 %v866, %v865
          %v892 = vpack.c.bf16 %v868, %v867
          %v893 = vpack.c.bf16 %v870, %v869
          %v894 = vpack.c.bf16 %v872, %v871
          %v895 = vpack.c.bf16 %v874, %v873
          %v896 = vpack.c.bf16 %v876, %v875
          %v897 = vpack.c.bf16 %v878, %v877
          %v898 = vpack.c.bf16 %v880, %v879
          %v899 = vpack.c.bf16 %v882, %v881
          %v900 = vpack.c.bf16 %v884, %v883
          %v917 = vunpack.c.l.b16 %v885
          %v918 = vunpack.c.h.b16 %v885
          %v919 = vunpack.c.l.b16 %v886
          %v920 = vunpack.c.h.b16 %v886
          %v921 = vunpack.c.l.b16 %v887
          %v922 = vunpack.c.h.b16 %v887
          %v923 = vunpack.c.l.b16 %v888
          %v924 = vunpack.c.h.b16 %v888
          %v925 = vunpack.c.l.b16 %v889
          %v926 = vunpack.c.h.b16 %v889
          %v927 = vunpack.c.l.b16 %v890
          %v928 = vunpack.c.h.b16 %v890
          %v929 = vunpack.c.l.b16 %v891
          %v930 = vunpack.c.h.b16 %v891
          %v931 = vunpack.c.l.b16 %v892
          %v932 = vunpack.c.h.b16 %v892
          %v933 = vunpack.c.l.b16 %v893
          %v934 = vunpack.c.h.b16 %v893
          %v935 = vunpack.c.l.b16 %v894
          %v936 = vunpack.c.h.b16 %v894
          %v937 = vunpack.c.l.b16 %v895
          %v938 = vunpack.c.h.b16 %v895
          %v939 = vunpack.c.l.b16 %v896
          %v940 = vunpack.c.h.b16 %v896
          %v941 = vunpack.c.l.b16 %v897
          %v942 = vunpack.c.h.b16 %v897
          %v943 = vunpack.c.l.b16 %v898
          %v944 = vunpack.c.h.b16 %v898
          %v945 = vunpack.c.l.b16 %v899
          %v946 = vunpack.c.h.b16 %v899
          %v947 = vunpack.c.l.b16 %v900
          %v948 = vunpack.c.h.b16 %v900
          %v949 = vpack.c.b16 %v917, %v917
          %v950 = vpack.c.b16 %v918, %v918
          %v951 = vpack.c.b16 %v919, %v919
          %v952 = vpack.c.b16 %v920, %v920
          %v953 = vpack.c.b16 %v921, %v921
          %v954 = vpack.c.b16 %v922, %v922
          %v955 = vpack.c.b16 %v923, %v923
          %v956 = vpack.c.b16 %v924, %v924
          %v957 = vpack.c.b16 %v925, %v925
          %v958 = vpack.c.b16 %v926, %v926
          %v959 = vpack.c.b16 %v927, %v927
          %v960 = vpack.c.b16 %v928, %v928
          %v961 = vpack.c.b16 %v929, %v929
          %v962 = vpack.c.b16 %v930, %v930
          %v963 = vpack.c.b16 %v931, %v931
          %v964 = vpack.c.b16 %v932, %v932
          %v965 = vpack.c.b16 %v933, %v933
          %v966 = vpack.c.b16 %v934, %v934
          %v967 = vpack.c.b16 %v935, %v935
          %v968 = vpack.c.b16 %v936, %v936
          %v969 = vpack.c.b16 %v937, %v937
          %v970 = vpack.c.b16 %v938, %v938
          %v971 = vpack.c.b16 %v939, %v939
          %v972 = vpack.c.b16 %v940, %v940
          %v973 = vpack.c.b16 %v941, %v941
          %v974 = vpack.c.b16 %v942, %v942
          %v975 = vpack.c.b16 %v943, %v943
          %v976 = vpack.c.b16 %v944, %v944
          %v977 = vpack.c.b16 %v945, %v945
          %v978 = vpack.c.b16 %v946, %v946
          %v979 = vpack.c.b16 %v947, %v947
          %v980 = vpack.c.b16 %v948, %v948
          %1013 = vst [vmem:[%s230] sm:$0xf] %v949
          %1014 = vst [vmem:[%s230 + $0x4] sm:$0xf] %v950
          %1015 = vst [vmem:[%s230 + $0x8] sm:$0xf] %v951
          %1016 = vst [vmem:[%s230 + $0xc] sm:$0xf] %v952
          %1017 = vst [vmem:[%s230 + $0x10] sm:$0xf] %v953
          %1018 = vst [vmem:[%s230 + $0x14] sm:$0xf] %v954
          %1019 = vst [vmem:[%s230 + $0x18] sm:$0xf] %v955
          %1020 = vst [vmem:[%s230 + $0x1c] sm:$0xf] %v956
          %1021 = vst [vmem:[%s230 + $0x20] sm:$0xf] %v957
          %1022 = vst [vmem:[%s230 + $0x24] sm:$0xf] %v958
          %1023 = vst [vmem:[%s230 + $0x28] sm:$0xf] %v959
          %1024 = vst [vmem:[%s230 + $0x2c] sm:$0xf] %v960
          %1025 = vst [vmem:[%s230 + $0x30] sm:$0xf] %v961
          %1026 = vst [vmem:[%s230 + $0x34] sm:$0xf] %v962
          %1027 = vst [vmem:[%s230 + $0x38] sm:$0xf] %v963
          %1028 = vst [vmem:[%s230 + $0x3c] sm:$0xf] %v964
          %1029 = vst [vmem:[%s230 + $0x40] sm:$0xf] %v965
          %1030 = vst [vmem:[%s230 + $0x44] sm:$0xf] %v966
          %1031 = vst [vmem:[%s230 + $0x48] sm:$0xf] %v967
          %1032 = vst [vmem:[%s230 + $0x4c] sm:$0xf] %v968
          %1033 = vst [vmem:[%s230 + $0x50] sm:$0xf] %v969
          %1034 = vst [vmem:[%s230 + $0x54] sm:$0xf] %v970
          %1035 = vst [vmem:[%s230 + $0x58] sm:$0xf] %v971
          %1036 = vst [vmem:[%s230 + $0x5c] sm:$0xf] %v972
          %1037 = vst [vmem:[%s230 + $0x60] sm:$0xf] %v973
          %1038 = vst [vmem:[%s230 + $0x64] sm:$0xf] %v974
          %1039 = vst [vmem:[%s230 + $0x68] sm:$0xf] %v975
          %1040 = vst [vmem:[%s230 + $0x6c] sm:$0xf] %v976
          %1041 = vst [vmem:[%s230 + $0x70] sm:$0xf] %v977
          %1042 = vst [vmem:[%s230 + $0x74] sm:$0xf] %v978
          %1043 = vst [vmem:[%s230 + $0x78] sm:$0xf] %v979
          %1044 = vst [vmem:[%s230 + $0x7c] sm:$0xf] %v980
        $region44: #{tpu_custom_call.1} parent=27 // pred_fallthru
          _
        %s1045 = sand.u32 %s107, 1
        %s1046 = scalar_lea.sflag [#allocation5], %s1045
        %s1047 = sand.u32 %s107, 1
        %s1048 = smul.addr %s1047, 128
        %s1049 = scalar_lea.vmem [#allocation8], %s1048
        // Predicated region
        $region45: #{tpu_custom_call.1} parent=27 // pred_check
          %p1050 = pneg %p117
        $region46: #{tpu_custom_call.1} parent=27 // pred_check_branch
          %1052 = sbr.rel (%p1050) target = $region48
        $region47: #{tpu_custom_call.1} parent=27 // pred_region
          %s1053 = smul.u32 32, %s27
          %s1055 = ssub.s32 2048, 2048
          %1056 = vsyncadd %s1046, %s1055
          %s1057 = sadd.s32 %s28, %s1053
          %s1058 = smul.addr %s1057, 64
          %s1059 = scalar_lea.hbm %s2, %s1058
          %s1060 = sshll.u32 %s1049, 4
          %s1061 = int_to_ptr.vmem [resolvable:$true] %s1060
          %1066 = dma.vmem_to_hbm [thread:$0]  %s1061, 2048, %s1059, %s1046, 64, 64, 4
        $region48: #{tpu_custom_call.1} parent=27 // pred_fallthru
          _
      $region28: #{tpu_custom_call.1} parent=5 // pred_fallthru
        _
      %p1067 = scmp.le.s32.totalorder 2, %s17
      // Predicated region
      $region49: #{tpu_custom_call.1} parent=5 // pred_check
        %p1068 = pneg %p1067
      $region50: #{tpu_custom_call.1} parent=5 // pred_check_branch
        %1070 = sbr.rel (%p1068) target = $region52
      $region51: #{tpu_custom_call.1} parent=5 // pred_region
        %s1071 = ssub.s32 %s17, 2
        // Predicated region
        $region53: #{tpu_custom_call.1} parent=51 // pred_check
          %p1072 = pneg %p123
        $region54: #{tpu_custom_call.1} parent=51 // pred_check_branch
          %1074 = sbr.rel (%p1072) target = $region56
        $region55: #{tpu_custom_call.1} parent=51 // pred_region
          %s1075 = sand.u32 %s108, 1
          %s1076 = scalar_lea.sflag [#allocation5], %s1075
          %s1077 = sand.u32 %s108, 1
          %s1078 = smul.addr %s1077, 128
          %s1079 = scalar_lea.vmem [#allocation8], %s1078
          %1080 = dma.done %s1076, 2048
        $region56: #{tpu_custom_call.1} parent=51 // pred_fallthru
          _
      $region52: #{tpu_custom_call.1} parent=5 // pred_fallthru
        _
    $region6: #{tpu_custom_call.1} parent=1 // loop_footer
      %s21 = sadd.s32 1, %s17
    $region7: #{tpu_custom_call.1} parent=1 // loop_footer_branch
      %16 = sbr.rel target = $region3
    $region8: #{tpu_custom_call.1} parent=1 // loop_exit
      _
    %1081 = vsyncpa [#allocation4], 1
    %s1082 = scalar_lea.sflag [#allocation4], 1
    %1083 = vsyncpa %s1082, 1
    %1084 = vsyncpa [#allocation7], 1
    %s1085 = scalar_lea.sflag [#allocation7], 1
    %1086 = vsyncpa %s1085, 1
    %1087 = vsyncpa [#allocation5], 1
    %s1088 = scalar_lea.sflag [#allocation5], 1
    %1089 = vsyncpa %s1088, 1

</llo_original>
